<compile_context>
chip_gen: v7x
topology: tpu7x:2x2x1
jax: 0.10.0
libtpu: 0.0.40
codegen_flags: <defaults>
</compile_context>

<pallas_src>
import functools

import jax
import jax.numpy as jnp
from jax.experimental import pallas as pl
from jax.experimental.pallas import tpu as pltpu


# ---------------------------------------------------------------------------
# Kernels
# ---------------------------------------------------------------------------
def _linear_sigmoid_kernel_f32out(x_ref, w_ref, b_ref, o_ref):
    """f32 output: accumulate directly into the resident output block."""
    k = pl.program_id(2)
    partial = jnp.dot(x_ref[...], w_ref[...], preferred_element_type=jnp.float32)

    @pl.when(k == 0)
    def _first():
        o_ref[...] = partial

    @pl.when(k > 0)
    def _accum():
        o_ref[...] += partial

    @pl.when(k == pl.num_programs(2) - 1)
    def _finalize():
        o_ref[...] = jax.nn.sigmoid(o_ref[...] + b_ref[...])


def _linear_sigmoid_kernel_acc(x_ref, w_ref, b_ref, o_ref, acc_ref):
    """Narrow (e.g. bf16) output: f32 VMEM scratch accumulator, cast at store."""
    k = pl.program_id(2)
    partial = jnp.dot(x_ref[...], w_ref[...], preferred_element_type=jnp.float32)

    @pl.when(k == 0)
    def _first():
        acc_ref[...] = partial

    @pl.when(k > 0)
    def _accum():
        acc_ref[...] += partial

    @pl.when(k == pl.num_programs(2) - 1)
    def _finalize():
        o_ref[...] = jax.nn.sigmoid(acc_ref[...] + b_ref[...]).astype(o_ref.dtype)


# ---------------------------------------------------------------------------
# Tiling plan
# ---------------------------------------------------------------------------
def _round_up(n, m):
    return -(-n // m) * m


def _fit_tile(dim, req, align):
    """Balanced tile size: <= req, multiple of `align`, minimal padding of dim."""
    dim_p = _round_up(dim, align)
    req = max(align, min(req, dim_p))
    splits = -(-dim_p // req)
    return _round_up(-(-dim_p // splits), align)


def _footprint_bytes(tm, tn, tk, in_bytes, out_bytes, use_acc):
    # 2x input double-buffers + 2x bias + 2x output buffers (+ acc scratch).
    return (2 * tm * tk * in_bytes
            + 2 * tk * tn * in_bytes
            + 2 * tn * 4
            + 2 * tm * tn * out_bytes
            + (tm * tn * 4 if use_acc else 0))


_VMEM_BUDGET = 24 << 20   # safe under v5e/v6e/v7x with vmem_limit_bytes=48 MiB


def _plan_nk_tiles(K, N, tm_req, tn_req, tk_cap, in_bytes, out_bytes, use_acc):
    tn = _fit_tile(N, tn_req, 128)
    tk = _fit_tile(K, tk_cap, 128)   # grow tk toward Kp (fewer K grid steps)
    while (_footprint_bytes(tm_req, tn, tk, in_bytes, out_bytes, use_acc)
           > _VMEM_BUDGET and tk > 256):
        tk = _fit_tile(K, max(128, tk // 2), 128)
    while (_footprint_bytes(tm_req, tn, tk, in_bytes, out_bytes, use_acc)
           > _VMEM_BUDGET and tn > 256):
        tn = _fit_tile(N, max(128, tn // 2), 128)
    return tn, tk


# ---------------------------------------------------------------------------
# Parameter preparation (run ONCE per layer; hoisted out of the hot path)
# ---------------------------------------------------------------------------
def prepare_linear_params(w_t, b, *, tm_req=512, tn_req=1024, tk_cap=2048,
                          compute_dtype=jnp.bfloat16, out_dtype=jnp.float32):
    """Pads/casts weights+bias once and returns (wp, bp, static_plan_kwargs)."""
    K, N = w_t.shape
    b = b.reshape(1, N)
    in_bytes = jnp.dtype(compute_dtype).itemsize
    out_bytes = jnp.dtype(out_dtype).itemsize
    use_acc = jnp.dtype(out_dtype) != jnp.dtype(jnp.float32)

    tn, tk = _plan_nk_tiles(K, N, tm_req, tn_req, tk_cap,
                            in_bytes, out_bytes, use_acc)
    Kp, Np = _round_up(K, tk), _round_up(N, tn)

    wp = jnp.zeros((Kp, Np), compute_dtype).at[:K, :N].set(
        w_t.astype(compute_dtype))
    bp = jnp.zeros((1, Np), jnp.float32).at[:, :N].set(b.astype(jnp.float32))

    plan = dict(k=K, n=N, tm_req=tm_req, tn=tn, tk=tk,
                compute_dtype=compute_dtype, out_dtype=out_dtype)
    return wp, bp, plan


# ---------------------------------------------------------------------------
# Per-call apply (jitted; only x is touched here)
# ---------------------------------------------------------------------------
@functools.partial(
    jax.jit,
    static_argnames=("k", "n", "tm_req", "tn", "tk", "compute_dtype", "out_dtype"))
def linear_block_apply(x, wp, bp, *, k, n, tm_req, tn, tk,
                       compute_dtype, out_dtype):
    M, K = x.shape
    assert K == k
    Kp, Np = wp.shape

    tm = _fit_tile(M, tm_req, 16)
    Mp = _round_up(M, tm)

    # Skip the pad/copy pass entirely when x is already tile-aligned.
    if Mp == M and Kp == K:
        xp = x if x.dtype == jnp.dtype(compute_dtype) else x.astype(compute_dtype)
    else:
        xp = jnp.zeros((Mp, Kp), compute_dtype).at[:M, :K].set(
            x.astype(compute_dtype))

    grid = (Mp // tm, Np // tn, Kp // tk)
    use_acc = jnp.dtype(out_dtype) != jnp.dtype(jnp.float32)
    kernel = _linear_sigmoid_kernel_acc if use_acc else _linear_sigmoid_kernel_f32out
    scratch = [pltpu.VMEM((tm, tn), jnp.float32)] if use_acc else []

    in_bytes = jnp.dtype(compute_dtype).itemsize
    out_bytes = jnp.dtype(out_dtype).itemsize
    cost = pl.CostEstimate(
        flops=2 * Mp * Np * Kp,
        transcendentals=Mp * Np,                      # sigmoid exp per element
        bytes_accessed=(Mp * Kp * in_bytes * (Np // tn)    # x streamed per N col
                        + Kp * Np * in_bytes * (Mp // tm)  # W streamed per M row
                        + Np * 4 * (Mp // tm)              # bias
                        + Mp * Np * out_bytes),            # output writeback
    )

    yp = pl.pallas_call(
        kernel,
        out_shape=jax.ShapeDtypeStruct((Mp, Np), out_dtype),
        grid_spec=pltpu.PrefetchScalarGridSpec(
            num_scalar_prefetch=0,
            grid=grid,
            in_specs=[
                pl.BlockSpec((tm, tk), lambda i, j, kk: (i, kk)),   # x tile
                pl.BlockSpec((tk, tn), lambda i, j, kk: (kk, j)),   # W tile
                pl.BlockSpec((1, tn), lambda i, j, kk: (0, j)),     # bias tile
            ],
            out_specs=pl.BlockSpec((tm, tn), lambda i, j, kk: (i, j)),
            scratch_shapes=scratch,
        ),
        compiler_params=pltpu.CompilerParams(
            dimension_semantics=("parallel", "parallel", "arbitrary"),
            vmem_limit_bytes=48 << 20,
        ),
        cost_estimate=cost,
    )(xp, wp, bp)

    return yp[:M, :n]


def linear_block(x, w_t, b, **kwargs):
    """One-shot convenience. For repeated calls, hoist prepare_linear_params."""
    wp, bp, plan = prepare_linear_params(w_t, b, **kwargs)
    return linear_block_apply(x, wp, bp, **plan)


# ---------------------------------------------------------------------------
# Test harness
# ---------------------------------------------------------------------------
def init_linear_params(key, inchannel, outchannel, dtype=jnp.float32):
    # Mirrors torch nn.Linear default init: U(-1/sqrt(in), 1/sqrt(in)).
    kw, kb = jax.random.split(key)
    bound = 1.0 / (inchannel ** 0.5)
    w = jax.random.uniform(kw, (outchannel, inchannel), dtype,
                           minval=-bound, maxval=bound)
    b = jax.random.uniform(kb, (outchannel,), dtype,
                           minval=-bound, maxval=bound)
    return w.T, b.reshape(1, outchannel)   # store weight transposed (in, out)


def reference(x, w_t, b):
    return jax.nn.sigmoid(x @ w_t + b)


def _bf16_ref(x, w_t, b):
    return reference(x.astype(jnp.bfloat16).astype(jnp.float32),
                     w_t.astype(jnp.bfloat16).astype(jnp.float32), b)


if __name__ == "__main__":
    key = jax.random.PRNGKey(0)
    k_x, k_p, k_x2, k_p2, k_x3, k_p3 = jax.random.split(key, 6)

    # --- Small shape matching the module (Linear(32 -> 64), batch 8) --------
    batch, inchannel, outchannel = 8, 32, 64
    x = jax.random.normal(k_x, (batch, inchannel), jnp.float32)
    w_t, b = init_linear_params(k_p, inchannel, outchannel)

    wp, bp, plan = prepare_linear_params(w_t, b)       # weight prep hoisted
    out = jax.block_until_ready(linear_block_apply(x, wp, bp, **plan))
    assert out.shape == (batch, outchannel)
    assert jnp.allclose(out, _bf16_ref(x, w_t, b), atol=2e-3, rtol=2e-3)
    assert jnp.allclose(out, reference(x, w_t, b), atol=3e-2, rtol=3e-2)

    # --- Ragged shape exercising multi-step K accumulation + padding --------
    M2, K2, N2 = 200, 640, 384
    x2 = jax.random.normal(k_x2, (M2, K2), jnp.float32)
    w2, b2 = init_linear_params(k_p2, K2, N2)
    wp2, bp2, plan2 = prepare_linear_params(
        w2, b2, tm_req=64, tn_req=128, tk_cap=256)      # grid = (4, 3, 3)
    out2 = jax.block_until_ready(linear_block_apply(x2, wp2, bp2, **plan2))
    assert out2.shape == (M2, N2)
    assert jnp.allclose(out2, _bf16_ref(x2, w2, b2), atol=2e-3, rtol=2e-3)

    # --- Aligned shape exercising the no-pad fast path -----------------------
    M3, K3, N3 = 128, 128, 128
    x3 = jax.random.normal(k_x3, (M3, K3), jnp.float32)
    w3, b3 = init_linear_params(k_p3, K3, N3)
    out3 = jax.block_until_ready(linear_block(x3, w3, b3))
    assert out3.shape == (M3, N3)
    assert jnp.allclose(out3, _bf16_ref(x3, w3, b3), atol=2e-3, rtol=2e-3)

    print("KERNEL_OK")
</pallas_src>

<mosaic_0001>
module attributes {stable_mosaic.version = 11 : i64} {
  func.func @_linear_sigmoid_kernel_f32out(%arg0: i32, %arg1: i32, %arg2: i32, %arg3: memref<16x128xbf16, #tpu.memory_space<vmem>>, %arg4: memref<128x128xbf16, #tpu.memory_space<vmem>>, %arg5: memref<1x128xf32, #tpu.memory_space<vmem>>, %arg6: memref<16x128xf32, #tpu.memory_space<vmem>>) attributes {dimension_semantics = [#tpu.dimension_semantics<parallel>, #tpu.dimension_semantics<parallel>, #tpu.dimension_semantics<arbitrary>], iteration_bounds = array<i64: 1, 1, 1>, scalar_prefetch = 0 : i64, scratch_operands = 0 : i64, tpu.core_type = #tpu.core_type<tc>, window_params = [{transform_indices = @transform_0, window_bounds = array<i64: 16, 128>}, {transform_indices = @transform_1, window_bounds = array<i64: 128, 128>}, {transform_indices = @transform_2, window_bounds = array<i64: 1, 128>}, {transform_indices = @transform_3, window_bounds = array<i64: 16, 128>}]} {
    %c0 = arith.constant 0 : index
    %c0_0 = arith.constant 0 : index
    %0 = vector.load %arg3[%c0, %c0_0] : memref<16x128xbf16, #tpu.memory_space<vmem>>, vector<16x128xbf16>
    %c0_1 = arith.constant 0 : index
    %c0_2 = arith.constant 0 : index
    %1 = vector.load %arg4[%c0_1, %c0_2] : memref<128x128xbf16, #tpu.memory_space<vmem>>, vector<128x128xbf16>
    %cst = arith.constant dense<0.000000e+00> : vector<16x128xf32>
    %2 = tpu.matmul %0, %1, %cst {dimension_numbers = #tpu.dot_dimension_numbers<[1], [0], [0], [1], [0, 0, 1, 1], [], []>} : vector<16x128xbf16>, vector<128x128xbf16>, vector<16x128xf32> -> vector<16x128xf32>
    %c0_i32 = arith.constant 0 : i32
    %3 = arith.cmpi eq, %arg2, %c0_i32 : i32
    %4 = arith.extui %3 : i1 to i32
    %c0_i32_3 = arith.constant 0 : i32
    %5 = arith.cmpi ne, %4, %c0_i32_3 : i32
    scf.if %5 {
      %c0_8 = arith.constant 0 : index
      %c0_9 = arith.constant 0 : index
      %12 = vector.load %arg6[%c0_8, %c0_9] : memref<16x128xf32, #tpu.memory_space<vmem>>, vector<16x128xf32>
      tpu.vector_store %arg6[%c0_8, %c0_9], %2 {strides = array<i32>} : memref<16x128xf32, #tpu.memory_space<vmem>>, vector<16x128xf32>,
    } else {
    }
    %c0_i32_4 = arith.constant 0 : i32
    %6 = arith.cmpi sgt, %arg2, %c0_i32_4 : i32
    %7 = arith.extui %6 : i1 to i32
    %c0_i32_5 = arith.constant 0 : i32
    %8 = arith.cmpi ne, %7, %c0_i32_5 : i32
    scf.if %8 {
      %c0_8 = arith.constant 0 : index
      %c0_9 = arith.constant 0 : index
      %12 = vector.load %arg6[%c0_8, %c0_9] : memref<16x128xf32, #tpu.memory_space<vmem>>, vector<16x128xf32>
      %13 = arith.addf %12, %2 : vector<16x128xf32>
      %c0_10 = arith.constant 0 : index
      %c0_11 = arith.constant 0 : index
      %14 = vector.load %arg6[%c0_10, %c0_11] : memref<16x128xf32, #tpu.memory_space<vmem>>, vector<16x128xf32>
      tpu.vector_store %arg6[%c0_10, %c0_11], %13 {strides = array<i32>} : memref<16x128xf32, #tpu.memory_space<vmem>>, vector<16x128xf32>,
    } else {
    }
    %c0_i32_6 = arith.constant 0 : i32
    %9 = arith.cmpi eq, %arg2, %c0_i32_6 : i32
    %10 = arith.extui %9 : i1 to i32
    %c0_i32_7 = arith.constant 0 : i32
    %11 = arith.cmpi ne, %10, %c0_i32_7 : i32
    scf.if %11 {
      %c0_8 = arith.constant 0 : index
      %c0_9 = arith.constant 0 : index
      %12 = vector.load %arg6[%c0_8, %c0_9] : memref<16x128xf32, #tpu.memory_space<vmem>>, vector<16x128xf32>
      %c0_10 = arith.constant 0 : index
      %c0_11 = arith.constant 0 : index
      %13 = vector.load %arg5[%c0_10, %c0_11] : memref<1x128xf32, #tpu.memory_space<vmem>>, vector<1x128xf32>
      %14 = vector.broadcast %13 : vector<1x128xf32> to vector<16x128xf32>
      %15 = arith.addf %12, %14 : vector<16x128xf32>
      %16 = arith.negf %15 : vector<16x128xf32>
      %17 = math.exp %16 : vector<16x128xf32>
      %cst_12 = arith.constant 1.000000e+00 : f32
      %18 = vector.broadcast %cst_12 : f32 to vector<16x128xf32>
      %19 = arith.addf %18, %17 : vector<16x128xf32>
      %20 = arith.divf %18, %19 : vector<16x128xf32>
      %c0_13 = arith.constant 0 : index
      %c0_14 = arith.constant 0 : index
      %21 = vector.load %arg6[%c0_13, %c0_14] : memref<16x128xf32, #tpu.memory_space<vmem>>, vector<16x128xf32>
      tpu.vector_store %arg6[%c0_13, %c0_14], %20 {strides = array<i32>} : memref<16x128xf32, #tpu.memory_space<vmem>>, vector<16x128xf32>,
    } else {
    }
    return
  }
  func.func @transform_0(%arg0: i32, %arg1: i32, %arg2: i32) -> (i32, i32) {
    %c0_i32 = arith.constant 0 : i32
    return %arg0, %arg2 : i32, i32
  }
  func.func @transform_1(%arg0: i32, %arg1: i32, %arg2: i32) -> (i32, i32) {
    %c0_i32 = arith.constant 0 : i32
    return %arg2, %arg1 : i32, i32
  }
  func.func @transform_2(%arg0: i32, %arg1: i32, %arg2: i32) -> (i32, i32) {
    %c0_i32 = arith.constant 0 : i32
    %c0_i32_0 = arith.constant 0 : i32
    return %c0_i32, %arg1 : i32, i32
  }
  func.func @transform_3(%arg0: i32, %arg1: i32, %arg2: i32) -> (i32, i32) {
    %c0_i32 = arith.constant 0 : i32
    return %arg0, %arg1 : i32, i32
  }
}

</mosaic_0001>

<llo_original>
// kernel: linear_block_apply.1
$region0: #{linear_block_apply.1}
  #allocation0 [shape = 'u32[]', space=smem, size = 0x4, offset = 0x4, fixed_abs, tag = 'smem constant byte address 0x4 - core index']
  #allocation1 [shape = 'u32[144,128]{1,0:T(1,128)}', space=vmem, size = 0x12000, scoped, tag = 'internal scratch']
  %s0 = inlined_call_operand.vmem [shape: bf16[16,128], index: 0, kind: input, shape index: {}]
  %s1 = inlined_call_operand.hbm [shape: bf16[128,128], index: 1, kind: input, shape index: {}]
  %s2 = inlined_call_operand.vmem [shape: f32[1,128], index: 2, kind: input, shape index: {}]
  %s3 = inlined_call_operand.vmem [shape: f32[16,128], index: 3, kind: output, shape index: {}]
  %s4 = sld [smem:[#allocation0]]
  $region38: #{linear_block_apply.1} parent=0
    _
  %s6 = ssub.s32 1, %s4
  %s7 = scalar_select 0, %s6, %s4
  $region1: #{linear_block_apply.1} parent=0
    #allocation2 [shape = 'u8[32768]{0}', space=vmem, size = 0x8000, scoped, tag = 'input window, operand 1, single buffered']
    #allocation3 [shape = 's32[1]{0}', space=sflag, size = 0x4, scoped, tag = 'scoped memory for linear_block_apply.1']
    %8 = vsyncpa [#allocation3], 0
    // Predicated region
    $region2: #{linear_block_apply.1} parent=1 // pred_check
      _
    $region3: #{linear_block_apply.1} parent=1 // pred_check_branch
      %10 = sbr.rel (0) target = $region5
    $region4: #{linear_block_apply.1} parent=1 // pred_region
      _
    $region5: #{linear_block_apply.1} parent=1 // pred_fallthru
      _
    // Predicated region
    $region6: #{linear_block_apply.1} parent=1 // pred_check
      _
    $region7: #{linear_block_apply.1} parent=1 // pred_check_branch
      %12 = sbr.rel (0) target = $region9
    $region8: #{linear_block_apply.1} parent=1 // pred_region
      %s14 = ssub.s32 1024, 1024
      %15 = vsyncadd [#allocation3], %s14
      %s16 = sshll.u32 [#allocation2], 4
      %s17 = int_to_ptr.vmem [resolvable:$true] %s16
      %22 = dma.hbm_to_vmem [thread:$0]  %s1, 1024, %s17, [#allocation3], 64, 64, 4
    $region9: #{linear_block_apply.1} parent=1 // pred_fallthru
      _
    // Predicated region
    $region10: #{linear_block_apply.1} parent=1 // pred_check
      _
    $region11: #{linear_block_apply.1} parent=1 // pred_check_branch
      %24 = sbr.rel (0) target = $region13
    $region12: #{linear_block_apply.1} parent=1 // pred_region
      _
    $region13: #{linear_block_apply.1} parent=1 // pred_fallthru
      _
    // Predicated region
    $region14: #{linear_block_apply.1} parent=1 // pred_check
      _
    $region15: #{linear_block_apply.1} parent=1 // pred_check_branch
      %26 = sbr.rel (0) target = $region17
    $region16: #{linear_block_apply.1} parent=1 // pred_region
      %27 = dma.done [#allocation3], 1024
    $region17: #{linear_block_apply.1} parent=1 // pred_fallthru
      _
    %v29 = vld [vmem:[%s0] sm:$0xf]
    %v30 = vld [vmem:[%s0 + $0x4] sm:$0xf]
    %v31 = vld [vmem:[#allocation2] sm:$0xf]
    %v32 = vld [vmem:[#allocation2 + $0x4] sm:$0xf]
    %v33 = vld [vmem:[#allocation2 + $0x8] sm:$0xf]
    %v34 = vld [vmem:[#allocation2 + $0xc] sm:$0xf]
    %v35 = vld [vmem:[#allocation2 + $0x10] sm:$0xf]
    %v36 = vld [vmem:[#allocation2 + $0x14] sm:$0xf]
    %v37 = vld [vmem:[#allocation2 + $0x18] sm:$0xf]
    %v38 = vld [vmem:[#allocation2 + $0x1c] sm:$0xf]
    %v39 = vld [vmem:[#allocation2 + $0x20] sm:$0xf]
    %v40 = vld [vmem:[#allocation2 + $0x24] sm:$0xf]
    %v41 = vld [vmem:[#allocation2 + $0x28] sm:$0xf]
    %v42 = vld [vmem:[#allocation2 + $0x2c] sm:$0xf]
    %v43 = vld [vmem:[#allocation2 + $0x30] sm:$0xf]
    %v44 = vld [vmem:[#allocation2 + $0x34] sm:$0xf]
    %v45 = vld [vmem:[#allocation2 + $0x38] sm:$0xf]
    %v46 = vld [vmem:[#allocation2 + $0x3c] sm:$0xf]
    %v49 = vunpack.c.l.b16 %v29
    %v50 = vunpack.c.l.b16 %v30
    %v51 = vpack.c.b16 %v50, %v49
    %v69 = vunpack.c.l.b16 %v31
    %v70 = vunpack.c.l.b16 %v32
    %v71 = vunpack.c.l.b16 %v33
    %v72 = vunpack.c.l.b16 %v34
    %v73 = vunpack.c.l.b16 %v35
    %v74 = vunpack.c.l.b16 %v36
    %v75 = vunpack.c.l.b16 %v37
    %v76 = vunpack.c.l.b16 %v38
    %v77 = vunpack.c.l.b16 %v39
    %v78 = vunpack.c.l.b16 %v40
    %v79 = vunpack.c.l.b16 %v41
    %v80 = vunpack.c.l.b16 %v42
    %v81 = vunpack.c.l.b16 %v43
    %v82 = vunpack.c.l.b16 %v44
    %v83 = vunpack.c.l.b16 %v45
    %v84 = vunpack.c.l.b16 %v46
    %v85 = vpack.c.b16 %v70, %v69
    %v86 = vpack.c.b16 %v72, %v71
    %v87 = vpack.c.b16 %v74, %v73
    %v88 = vpack.c.b16 %v76, %v75
    %v89 = vpack.c.b16 %v78, %v77
    %v90 = vpack.c.b16 %v80, %v79
    %v91 = vpack.c.b16 %v82, %v81
    %v92 = vpack.c.b16 %v84, %v83
    %101 = vmatprep.subr.bf16.mxu0 0
    %102 = vmatpush1.bf16.msra.mxu0 %v85
    %103 = vmatprep.subr.bf16.mxu0 0
    %104 = vmatpush1.bf16.msra.mxu0 %v86
    %105 = vmatprep.subr.bf16.mxu0 0
    %106 = vmatpush1.bf16.msra.mxu0 %v87
    %107 = vmatprep.subr.bf16.mxu0 0
    %108 = vmatpush1.bf16.msra.mxu0 %v88
    %109 = vmatprep.subr.bf16.mxu0 0
    %110 = vmatpush1.bf16.msra.mxu0 %v89
    %111 = vmatprep.subr.bf16.mxu0 0
    %112 = vmatpush1.bf16.msra.mxu0 %v90
    %113 = vmatprep.subr.bf16.mxu0 0
    %114 = vmatpush1.bf16.msra.mxu0 %v91
    %115 = vmatprep.subr.bf16.mxu0 0
    %116 = vmatpush1.bf16.msra.mxu0 %v92
    %117 = vmatprep.subr.bf16.mxu0 0
    %118 = vmatpush1.bf16.msra.mxu0 0
    %119 = vmatprep.subr.bf16.mxu0 0
    %120 = vmatpush1.bf16.msra.mxu0 0
    %121 = vmatprep.subr.bf16.mxu0 0
    %122 = vmatpush1.bf16.msra.mxu0 0
    %123 = vmatprep.subr.bf16.mxu0 0
    %124 = vmatpush1.bf16.msra.mxu0 0
    %125 = vmatprep.subr.bf16.mxu0 0
    %126 = vmatpush1.bf16.msra.mxu0 0
    %127 = vmatprep.subr.bf16.mxu0 0
    %128 = vmatpush1.bf16.msra.mxu0 0
    %129 = vmatprep.subr.bf16.mxu0 0
    %130 = vmatpush1.bf16.msra.mxu0 0
    %131 = vmatprep.subr.bf16.mxu0 0
    %132 = vmatpush1.bf16.msra.mxu0 0
    %133 = vmatprep.mubr.bf16.mxu0 0
    %134 = vmatmul.mubr.bf16.gmra.mrb[0].mxu0 %v51
    %v135 = vpop.f32.mrb[0].mxu0
    %v136 = vadd.f32 0.0, %v135
    %v137 = vpop.f32.mrb[0].mxu0
    %v138 = vpop.f32.mrb[0].mxu0
    %v139 = vadd.f32 0.0, %v138
    %v140 = vpop.f32.mrb[0].mxu0
    %141 = vdwg.mxu0
    %p142 = scmp.eq.s32.totalorder 0, 0
    // Predicated region
    $region18: #{linear_block_apply.1} parent=1 // pred_check
      %p143 = pneg %p142
    $region19: #{linear_block_apply.1} parent=1 // pred_check_branch
      %145 = sbr.rel (%p143) target = $region21
    $region20: #{linear_block_apply.1} parent=1 // pred_region
      %146 = vst [vmem:[%s3] sm:$0xff] %v136
      %147 = vst [vmem:[%s3 + $0x8] sm:$0xff] %v139
    $region21: #{linear_block_apply.1} parent=1 // pred_fallthru
      _
    %p148 = scmp.gt.s32.totalorder 0, 0
    // Predicated region
    $region22: #{linear_block_apply.1} parent=1 // pred_check
      %p149 = pneg %p148
    $region23: #{linear_block_apply.1} parent=1 // pred_check_branch
      %151 = sbr.rel (%p149) target = $region25
    $region24: #{linear_block_apply.1} parent=1 // pred_region
      %v152 = vld [vmem:[%s3] sm:$0xff]
      %v153 = vld [vmem:[%s3 + $0x8] sm:$0xff]
      %v154 = vadd.f32 %v152, %v136
      %v155 = vadd.f32 %v153, %v139
      %156 = vst [vmem:[%s3] sm:$0xff] %v154
      %157 = vst [vmem:[%s3 + $0x8] sm:$0xff] %v155
    $region25: #{linear_block_apply.1} parent=1 // pred_fallthru
      _
    // Predicated region
    $region26: #{linear_block_apply.1} parent=1 // pred_check
      %p158 = pneg %p142
    $region27: #{linear_block_apply.1} parent=1 // pred_check_branch
      %160 = sbr.rel (%p158) target = $region29
    $region28: #{linear_block_apply.1} parent=1 // pred_region
      %v161 = vld [vmem:[%s3] sm:$0xff]
      %v162 = vld [vmem:[%s3 + $0x8] sm:$0xff]
      %v163 = vld [vmem:[%s2] sm:$0x1]
      %v165 = vlaneseq
      %v166 = vshrl.u32 %v165, 7
      %v167 = vsub.s32 0, %v166
      %v168 = vrot.slane %v163, %v167
      %v170 = vadd.f32 %v161, %v168
      %v171 = vadd.f32 %v162, %v168
      %v172 = vxor.u32 %v170, 2147483648
      %v173 = vxor.u32 %v171, 2147483648
      %v174 = vmul.f32 %v172, 1.442695
      %v175 = vpow.pop %v174
      %v176 = vmul.f32 %v173, 1.442695
      %v177 = vpow.pop %v176
      %v178 = vadd.f32 %v175, 1.0
      %v179 = vadd.f32 %v177, 1.0
      %v180 = vrcp.pop %v178
      %v181 = vmul.f32 1.0, %v180
      %v182 = vrcp.pop %v179
      %v183 = vmul.f32 1.0, %v182
      %184 = vst [vmem:[%s3] sm:$0xff] %v181
      %185 = vst [vmem:[%s3 + $0x8] sm:$0xff] %v183
    $region29: #{linear_block_apply.1} parent=1 // pred_fallthru
      _
    // Predicated region
    $region30: #{linear_block_apply.1} parent=1 // pred_check
      _
    $region31: #{linear_block_apply.1} parent=1 // pred_check_branch
      %187 = sbr.rel (0) target = $region33
    $region32: #{linear_block_apply.1} parent=1 // pred_region
      _
    $region33: #{linear_block_apply.1} parent=1 // pred_fallthru
      _
    // Predicated region
    $region34: #{linear_block_apply.1} parent=1 // pred_check
      _
    $region35: #{linear_block_apply.1} parent=1 // pred_check_branch
      %189 = sbr.rel (0) target = $region37
    $region36: #{linear_block_apply.1} parent=1 // pred_region
      _
    $region37: #{linear_block_apply.1} parent=1 // pred_fallthru
      _
    %190 = vsyncpa [#allocation3], 1

</llo_original>
